<compile_context>
chip_gen: v5e
topology: v5e:2x2
jax: 0.10.0
libtpu: 0.0.40
codegen_flags: <defaults>
</compile_context>

<pallas_src>
import functools
import math

import jax
import jax.numpy as jnp
from jax import lax
from jax.experimental import pallas as pl
from jax.experimental.pallas import tpu as pltpu


def _gelu_exact(x):
    # nn.GELU() default = exact erf formulation (matches PyTorch semantics).
    return 0.5 * x * (1.0 + lax.erf(x * (1.0 / math.sqrt(2.0))))


def _gelu_tanh(x):
    # tanh approximation: transcendental goes to the EUP slot, freeing the VPU,
    # but deviates ~1e-3 from exact GELU -> gated behind a flag.
    return jax.nn.gelu(x, approximate=True)


def dino_head_kernel(x_ref, w1_ref, b1_ref, w2_ref, b2_ref, w3_ref, b3_ref,
                     wl_ref, o_ref, *, approximate_gelu, matmul_dtype):
    gelu = _gelu_tanh if approximate_gelu else _gelu_exact

    def mm(a, w_ref):
        # Optional bf16 operands; always accumulate in f32 on the MXU.
        return jnp.dot(a.astype(matmul_dtype), w_ref[...].astype(matmul_dtype),
                       preferred_element_type=jnp.float32)

    x = x_ref[...]

    # --- MLP: Linear -> GELU -> Linear -> GELU -> Linear (bottleneck) ---
    h = gelu(mm(x, w1_ref) + b1_ref[...])
    h = gelu(mm(h, w2_ref) + b2_ref[...])
    z = mm(h, w3_ref) + b3_ref[...]

    # --- F.normalize(z, dim=-1, p=2), eps = 1e-12 ---
    # rsqrt(max(ss, (1e-12)^2)) == 1 / max(sqrt(ss), 1e-12); single EUP op.
    ss = jnp.sum(z * z, axis=-1, keepdims=True)
    z = z * lax.rsqrt(jnp.maximum(ss, 1e-24))

    # --- weight-normalized last layer (no bias); w_last precomputed in wrapper ---
    o_ref[...] = mm(z, wl_ref).astype(o_ref.dtype)


def _round_up(n, m):
    return ((n + m - 1) // m) * m


def dino_head_forward(x, params, *, tile_b=4096, approximate_gelu=False,
                      bf16_matmul=False, out_dtype=jnp.float32):
    """Run DINOHead forward.

    tile_b: batch tile (rounded to a multiple of 8).  At these head dims the
    working set is tiny, so 2048-8192 is the useful range on all generations;
    the tile is additionally capped so the grid has >= 2 steps (v7x megacore
    sharding + DMA/compute overlap).
    """
    (w1, b1, w2, b2, w3, b3, v_t, g) = params
    B, in_dim = x.shape
    hidden_dim = w1.shape[1]
    bottleneck_dim = w3.shape[1]
    out_dim = v_t.shape[1]

    # Hoist grid-invariant weight-norm out of the kernel:
    # PyTorch weight_norm(dim=0) normalizes each output row of V == each column of V^T.
    col_norm = jnp.sqrt(jnp.sum(v_t * v_t, axis=0, keepdims=True))  # (1, out_dim)
    w_last = v_t * (g / col_norm)                                   # g == 1 when norm_last_layer

    # Batch tile: multiple of 8, no larger than the (rounded-up) batch.
    eff_tile = max(8, min(_round_up(tile_b, 8), _round_up(B, 8)))
    # Guarantee >= 2 grid steps once there is enough batch to split: the
    # ("parallel",) axis only shards across the two v7x TensorCores (and only
    # overlaps DMA with compute) if the grid has more than one step.
    if B >= 16:
        eff_tile = min(eff_tile, _round_up((B + 1) // 2, 8))

    # cdiv grid + Pallas partial-block masking handles ragged batches:
    # no pad pass on x, no slice pass on the output.
    grid = (pl.cdiv(B, eff_tile),)

    def batch_map(i):
        return (i, 0)

    def fixed_map(i):
        return (0, 0)

    kernel = functools.partial(
        dino_head_kernel,
        approximate_gelu=approximate_gelu,
        matmul_dtype=jnp.bfloat16 if bf16_matmul else jnp.float32,
    )

    out = pl.pallas_call(
        kernel,
        out_shape=jax.ShapeDtypeStruct((B, out_dim), out_dtype),
        grid_spec=pltpu.PrefetchScalarGridSpec(
            num_scalar_prefetch=0,
            grid=grid,
            in_specs=[
                pl.BlockSpec((eff_tile, in_dim), batch_map),           # x
                pl.BlockSpec((in_dim, hidden_dim), fixed_map),         # w1^T
                pl.BlockSpec((1, hidden_dim), fixed_map),              # b1
                pl.BlockSpec((hidden_dim, hidden_dim), fixed_map),     # w2^T
                pl.BlockSpec((1, hidden_dim), fixed_map),              # b2
                pl.BlockSpec((hidden_dim, bottleneck_dim), fixed_map), # w3^T
                pl.BlockSpec((1, bottleneck_dim), fixed_map),          # b3
                pl.BlockSpec((bottleneck_dim, out_dim), fixed_map),    # w_last (pre-normalized)
            ],
            out_specs=pl.BlockSpec((eff_tile, out_dim), batch_map),
        ),
        compiler_params=pltpu.CompilerParams(
            dimension_semantics=("parallel",),
            # 32 MiB: enough for the <10 MiB working set even at 4096-row
            # tiles, raises the v5e 16 MiB scoped default, and leaves headroom
            # on v7x (64 MiB physical) for Mosaic internal scratch.
            vmem_limit_bytes=32 << 20,
        ),
    )(x, w1, b1, w2, b2, w3, b3, w_last)

    return out


def init_dino_head_params(key, in_dim, hidden_dim, bottleneck_dim, out_dim):
    """Deterministic init mirroring the module's __init__:
    Linear weights ~ trunc_normal(std=0.02), biases = 0, weight_norm g filled with 1."""
    def trunc_normal(k, shape, std=0.02):
        return jnp.clip(jax.random.normal(k, shape, jnp.float32) * std, -2.0, 2.0)

    ks = jax.random.split(key, 4)
    # stored pre-transposed: (in_features, out_features)
    w1 = trunc_normal(ks[0], (in_dim, hidden_dim))
    b1 = jnp.zeros((1, hidden_dim), jnp.float32)
    w2 = trunc_normal(ks[1], (hidden_dim, hidden_dim))
    b2 = jnp.zeros((1, hidden_dim), jnp.float32)
    w3 = trunc_normal(ks[2], (hidden_dim, bottleneck_dim))
    b3 = jnp.zeros((1, bottleneck_dim), jnp.float32)
    v_t = trunc_normal(ks[3], (bottleneck_dim, out_dim))   # weight_norm "original1" (transposed)
    g = jnp.ones((1, out_dim), jnp.float32)                # weight_norm "original0" fill_(1)
    return (w1, b1, w2, b2, w3, b3, v_t, g)


def dino_head_reference(x, params):
    """Pure-JAX reference for a sanity check."""
    (w1, b1, w2, b2, w3, b3, v_t, g) = params
    h = jax.nn.gelu(x @ w1 + b1, approximate=False)
    h = jax.nn.gelu(h @ w2 + b2, approximate=False)
    z = h @ w3 + b3
    z = z / jnp.maximum(jnp.linalg.norm(z, axis=-1, keepdims=True), 1e-12)
    w_last = v_t * (g / jnp.linalg.norm(v_t, axis=0, keepdims=True))
    return z @ w_last


if __name__ == "__main__":
    in_dim, hidden_dim, bottleneck_dim, out_dim = 32, 64, 32, 128

    key = jax.random.PRNGKey(0)
    kx, kp = jax.random.split(key)
    params = init_dino_head_params(kp, in_dim, hidden_dim, bottleneck_dim, out_dim)

    # batch=20: non-multiple of 8 -> ragged last block on a 2-step grid.
    # batch=8:  small-batch single-step path.
    for batch in (20, 8):
        x = jax.random.normal(jax.random.fold_in(kx, batch), (batch, in_dim), jnp.float32)
        out = jax.block_until_ready(dino_head_forward(x, params))
        ref = dino_head_reference(x, params)
        assert out.shape == (batch, out_dim)
        assert jnp.allclose(out, ref, atol=1e-5, rtol=1e-5)

    print("KERNEL_OK")
</pallas_src>

<mosaic_0001>
module attributes {stable_mosaic.version = 11 : i64} {
  func.func @dino_head_kernel(%arg0: i32, %arg1: memref<16x32xf32, #tpu.memory_space<vmem>>, %arg2: memref<32x64xf32, #tpu.memory_space<vmem>>, %arg3: memref<1x64xf32, #tpu.memory_space<vmem>>, %arg4: memref<64x64xf32, #tpu.memory_space<vmem>>, %arg5: memref<1x64xf32, #tpu.memory_space<vmem>>, %arg6: memref<64x32xf32, #tpu.memory_space<vmem>>, %arg7: memref<1x32xf32, #tpu.memory_space<vmem>>, %arg8: memref<32x128xf32, #tpu.memory_space<vmem>>, %arg9: memref<16x128xf32, #tpu.memory_space<vmem>>) attributes {dimension_semantics = [#tpu.dimension_semantics<parallel>], iteration_bounds = array<i64: 2>, scalar_prefetch = 0 : i64, scratch_operands = 0 : i64, tpu.core_type = #tpu.core_type<tc>, window_params = [{transform_indices = @transform_0, window_bounds = array<i64: 16, 32>}, {pipeline_mode = #tpu.pipeline_mode<synchronous>, transform_indices = @transform_1, window_bounds = array<i64: 32, 64>}, {pipeline_mode = #tpu.pipeline_mode<synchronous>, transform_indices = @transform_2, window_bounds = array<i64: 1, 64>}, {pipeline_mode = #tpu.pipeline_mode<synchronous>, transform_indices = @transform_3, window_bounds = array<i64: 64, 64>}, {pipeline_mode = #tpu.pipeline_mode<synchronous>, transform_indices = @transform_4, window_bounds = array<i64: 1, 64>}, {pipeline_mode = #tpu.pipeline_mode<synchronous>, transform_indices = @transform_5, window_bounds = array<i64: 64, 32>}, {pipeline_mode = #tpu.pipeline_mode<synchronous>, transform_indices = @transform_6, window_bounds = array<i64: 1, 32>}, {pipeline_mode = #tpu.pipeline_mode<synchronous>, transform_indices = @transform_7, window_bounds = array<i64: 32, 128>}, {transform_indices = @transform_8, window_bounds = array<i64: 16, 128>}]} {
    %c0 = arith.constant 0 : index
    %c0_0 = arith.constant 0 : index
    %0 = vector.load %arg1[%c0, %c0_0] : memref<16x32xf32, #tpu.memory_space<vmem>>, vector<16x32xf32>
    %c0_1 = arith.constant 0 : index
    %c0_2 = arith.constant 0 : index
    %1 = vector.load %arg2[%c0_1, %c0_2] : memref<32x64xf32, #tpu.memory_space<vmem>>, vector<32x64xf32>
    %cst = arith.constant dense<0.000000e+00> : vector<16x64xf32>
    %2 = tpu.matmul %0, %1, %cst {dimension_numbers = #tpu.dot_dimension_numbers<[1], [0], [0], [1], [0, 0, 1, 1], [], []>} : vector<16x32xf32>, vector<32x64xf32>, vector<16x64xf32> -> vector<16x64xf32>
    %c0_3 = arith.constant 0 : index
    %c0_4 = arith.constant 0 : index
    %3 = vector.load %arg3[%c0_3, %c0_4] : memref<1x64xf32, #tpu.memory_space<vmem>>, vector<1x64xf32>
    %4 = vector.broadcast %3 : vector<1x64xf32> to vector<16x64xf32>
    %5 = arith.addf %2, %4 : vector<16x64xf32>
    %cst_5 = arith.constant 5.000000e-01 : f32
    %6 = vector.broadcast %cst_5 : f32 to vector<16x64xf32>
    %7 = arith.mulf %6, %5 : vector<16x64xf32>
    %cst_6 = arith.constant 0.707106769 : f32
    %8 = vector.broadcast %cst_6 : f32 to vector<16x64xf32>
    %9 = arith.mulf %5, %8 : vector<16x64xf32>
    %10 = math.erf %9 : vector<16x64xf32>
    %cst_7 = arith.constant 1.000000e+00 : f32
    %11 = vector.broadcast %cst_7 : f32 to vector<16x64xf32>
    %12 = arith.addf %11, %10 : vector<16x64xf32>
    %13 = arith.mulf %7, %12 : vector<16x64xf32>
    %c0_8 = arith.constant 0 : index
    %c0_9 = arith.constant 0 : index
    %14 = vector.load %arg4[%c0_8, %c0_9] : memref<64x64xf32, #tpu.memory_space<vmem>>, vector<64x64xf32>
    %cst_10 = arith.constant dense<0.000000e+00> : vector<16x64xf32>
    %15 = tpu.matmul %13, %14, %cst_10 {dimension_numbers = #tpu.dot_dimension_numbers<[1], [0], [0], [1], [0, 0, 1, 1], [], []>} : vector<16x64xf32>, vector<64x64xf32>, vector<16x64xf32> -> vector<16x64xf32>
    %c0_11 = arith.constant 0 : index
    %c0_12 = arith.constant 0 : index
    %16 = vector.load %arg5[%c0_11, %c0_12] : memref<1x64xf32, #tpu.memory_space<vmem>>, vector<1x64xf32>
    %17 = vector.broadcast %16 : vector<1x64xf32> to vector<16x64xf32>
    %18 = arith.addf %15, %17 : vector<16x64xf32>
    %cst_13 = arith.constant 5.000000e-01 : f32
    %19 = vector.broadcast %cst_13 : f32 to vector<16x64xf32>
    %20 = arith.mulf %19, %18 : vector<16x64xf32>
    %cst_14 = arith.constant 0.707106769 : f32
    %21 = vector.broadcast %cst_14 : f32 to vector<16x64xf32>
    %22 = arith.mulf %18, %21 : vector<16x64xf32>
    %23 = math.erf %22 : vector<16x64xf32>
    %cst_15 = arith.constant 1.000000e+00 : f32
    %24 = vector.broadcast %cst_15 : f32 to vector<16x64xf32>
    %25 = arith.addf %24, %23 : vector<16x64xf32>
    %26 = arith.mulf %20, %25 : vector<16x64xf32>
    %c0_16 = arith.constant 0 : index
    %c0_17 = arith.constant 0 : index
    %27 = vector.load %arg6[%c0_16, %c0_17] : memref<64x32xf32, #tpu.memory_space<vmem>>, vector<64x32xf32>
    %cst_18 = arith.constant dense<0.000000e+00> : vector<16x32xf32>
    %28 = tpu.matmul %26, %27, %cst_18 {dimension_numbers = #tpu.dot_dimension_numbers<[1], [0], [0], [1], [0, 0, 1, 1], [], []>} : vector<16x64xf32>, vector<64x32xf32>, vector<16x32xf32> -> vector<16x32xf32>
    %c0_19 = arith.constant 0 : index
    %c0_20 = arith.constant 0 : index
    %29 = vector.load %arg7[%c0_19, %c0_20] : memref<1x32xf32, #tpu.memory_space<vmem>>, vector<1x32xf32>
    %30 = vector.broadcast %29 : vector<1x32xf32> to vector<16x32xf32>
    %31 = arith.addf %28, %30 : vector<16x32xf32>
    %32 = arith.mulf %31, %31 : vector<16x32xf32>
    %cst_21 = arith.constant dense<0.000000e+00> : vector<16xf32>
    %33 = vector.multi_reduction <add>, %32, %cst_21 [1] : vector<16x32xf32> to vector<16xf32>
    %34 = vector.shape_cast %33 : vector<16xf32> to vector<16x1xf32>
    %cst_22 = arith.constant 1.000000e-24 : f32
    %35 = vector.broadcast %cst_22 : f32 to vector<16x1xf32>
    %36 = arith.maximumf %34, %35 : vector<16x1xf32>
    %37 = math.rsqrt %36 : vector<16x1xf32>
    %38 = vector.broadcast %37 : vector<16x1xf32> to vector<16x32xf32>
    %39 = arith.mulf %31, %38 : vector<16x32xf32>
    %c0_23 = arith.constant 0 : index
    %c0_24 = arith.constant 0 : index
    %40 = vector.load %arg8[%c0_23, %c0_24] : memref<32x128xf32, #tpu.memory_space<vmem>>, vector<32x128xf32>
    %cst_25 = arith.constant dense<0.000000e+00> : vector<16x128xf32>
    %41 = tpu.matmul %39, %40, %cst_25 {dimension_numbers = #tpu.dot_dimension_numbers<[1], [0], [0], [1], [0, 0, 1, 1], [], []>} : vector<16x32xf32>, vector<32x128xf32>, vector<16x128xf32> -> vector<16x128xf32>
    %c0_26 = arith.constant 0 : index
    %c0_27 = arith.constant 0 : index
    %42 = vector.load %arg9[%c0_26, %c0_27] : memref<16x128xf32, #tpu.memory_space<vmem>>, vector<16x128xf32>
    tpu.vector_store %arg9[%c0_26, %c0_27], %41 {strides = array<i32>} : memref<16x128xf32, #tpu.memory_space<vmem>>, vector<16x128xf32>,
    return
  }
  func.func @transform_0(%arg0: i32) -> (i32, i32) {
    %c0_i32 = arith.constant 0 : i32
    %c0_i32_0 = arith.constant 0 : i32
    return %arg0, %c0_i32 : i32, i32
  }
  func.func @transform_1(%arg0: i32) -> (i32, i32) {
    %c0_i32 = arith.constant 0 : i32
    %c0_i32_0 = arith.constant 0 : i32
    %c0_i32_1 = arith.constant 0 : i32
    return %c0_i32, %c0_i32_0 : i32, i32
  }
  func.func @transform_2(%arg0: i32) -> (i32, i32) {
    %c0_i32 = arith.constant 0 : i32
    %c0_i32_0 = arith.constant 0 : i32
    %c0_i32_1 = arith.constant 0 : i32
    return %c0_i32, %c0_i32_0 : i32, i32
  }
  func.func @transform_3(%arg0: i32) -> (i32, i32) {
    %c0_i32 = arith.constant 0 : i32
    %c0_i32_0 = arith.constant 0 : i32
    %c0_i32_1 = arith.constant 0 : i32
    return %c0_i32, %c0_i32_0 : i32, i32
  }
  func.func @transform_4(%arg0: i32) -> (i32, i32) {
    %c0_i32 = arith.constant 0 : i32
    %c0_i32_0 = arith.constant 0 : i32
    %c0_i32_1 = arith.constant 0 : i32
    return %c0_i32, %c0_i32_0 : i32, i32
  }
  func.func @transform_5(%arg0: i32) -> (i32, i32) {
    %c0_i32 = arith.constant 0 : i32
    %c0_i32_0 = arith.constant 0 : i32
    %c0_i32_1 = arith.constant 0 : i32
    return %c0_i32, %c0_i32_0 : i32, i32
  }
  func.func @transform_6(%arg0: i32) -> (i32, i32) {
    %c0_i32 = arith.constant 0 : i32
    %c0_i32_0 = arith.constant 0 : i32
    %c0_i32_1 = arith.constant 0 : i32
    return %c0_i32, %c0_i32_0 : i32, i32
  }
  func.func @transform_7(%arg0: i32) -> (i32, i32) {
    %c0_i32 = arith.constant 0 : i32
    %c0_i32_0 = arith.constant 0 : i32
    %c0_i32_1 = arith.constant 0 : i32
    return %c0_i32, %c0_i32_0 : i32, i32
  }
  func.func @transform_8(%arg0: i32) -> (i32, i32) {
    %c0_i32 = arith.constant 0 : i32
    %c0_i32_0 = arith.constant 0 : i32
    return %arg0, %c0_i32 : i32, i32
  }
}

</mosaic_0001>

<llo_original>
// kernel: tpu_custom_call.1
$region0: #{tpu_custom_call.1}
  #allocation0 [shape = 'u32[]', space=smem, size = 0x4, offset = 0x4, fixed_abs, tag = 'smem constant byte address 0x4 - core index']
  #allocation1 [shape = 'u32[72,128]{1,0:T(1,128)}', space=vmem, size = 0x9000, scoped, tag = 'internal scratch']
  %s0 = inlined_call_operand.hbm [shape: f32[20,32], index: 0, kind: input, shape index: {}]
  %s1 = inlined_call_operand.vmem [shape: f32[32,64], index: 1, kind: input, shape index: {}]
  %s2 = inlined_call_operand.vmem [shape: f32[1,64], index: 2, kind: input, shape index: {}]
  %s3 = inlined_call_operand.vmem [shape: f32[64,64], index: 3, kind: input, shape index: {}]
  %s4 = inlined_call_operand.vmem [shape: f32[1,64], index: 4, kind: input, shape index: {}]
  %s5 = inlined_call_operand.vmem [shape: f32[64,32], index: 5, kind: input, shape index: {}]
  %s6 = inlined_call_operand.vmem [shape: f32[1,32], index: 6, kind: input, shape index: {}]
  %s7 = inlined_call_operand.hbm [shape: f32[32,128], index: 7, kind: input, shape index: {}]
  %s8 = inlined_call_operand.hbm [shape: f32[20,128], index: 8, kind: output, shape index: {}]
  %s9 = sld [smem:[#allocation0]]
  $region73: #{tpu_custom_call.1} parent=0
    _
  %s11 = ssub.s32 1, %s9
  %s12 = scalar_select 0, %s11, %s9
  $region1: #{tpu_custom_call.1} parent=0
    #allocation2 [shape = 'u8[16384]{0}', space=vmem, size = 0x4000, scoped, tag = 'input window, operand 0']
    #allocation3 [shape = 's32[2]{0}', space=sflag, size = 0x8, scoped, tag = 'scoped memory for tpu_custom_call.1']
    #allocation4 [shape = 's32[2]{0}', space=sflag, size = 0x8, scoped, tag = 'scoped memory for tpu_custom_call.1']
    #allocation5 [shape = 'u8[16384]{0}', space=vmem, size = 0x4000, scoped, tag = 'input window, operand 7, single buffered']
    #allocation6 [shape = 's32[1]{0}', space=sflag, size = 0x4, scoped, tag = 'scoped memory for tpu_custom_call.1']
    #allocation7 [shape = 'u8[16384]{0}', space=vmem, size = 0x4000, scoped, tag = 'output window, operand 0']
    %13 = vsyncpa [#allocation3], 0
    %s14 = scalar_lea.sflag [#allocation3], 1
    %15 = vsyncpa %s14, 0
    %16 = vsyncpa [#allocation6], 0
    %17 = vsyncpa [#allocation4], 0
    %s18 = scalar_lea.sflag [#allocation4], 1
    %19 = vsyncpa %s18, 0
    loop: start=0, step=1, limit=4
    $region2: #{tpu_custom_call.1} parent=1 // loop_pre_header
      _
    $region3: #{tpu_custom_call.1} parent=1 // loop_header
      %s21 = sphi 0, %s25
      %p22 = scmp.ge.s32.totalorder %s21, 4
      %s31 = sphi 0, %s33
      %s34 = sphi 0, %s31
      %s35 = sphi 0, %s34
      %s51 = sphi 0, %s35
      %s55 = sphi 0, %s55
      %s57 = sphi 0, %s55
      %s58 = sphi 0, %s57
      %s72 = sphi 0, %s58
      %s76 = sphi 0, %s76
      %s78 = sphi 0, %s76
      %s79 = sphi 0, %s78
      %s93 = sphi 0, %s79
      %s97 = sphi 0, %s97
      %s99 = sphi 0, %s97
      %s100 = sphi 0, %s99
      %s114 = sphi 0, %s100
      %s118 = sphi 0, %s118
      %s120 = sphi 0, %s118
      %s121 = sphi 0, %s120
      %s135 = sphi 0, %s121
      %s139 = sphi 0, %s139
      %s141 = sphi 0, %s139
      %s142 = sphi 0, %s141
      %s156 = sphi 0, %s142
      %s160 = sphi 0, %s160
      %s162 = sphi 0, %s160
      %s163 = sphi 0, %s162
      %s177 = sphi 0, %s163
      %s181 = sphi 0, %s181
      %s183 = sphi 0, %s181
      %s184 = sphi 0, %s183
      %s198 = sphi 0, %s184
      %s204 = sphi 0, %s206
      %s207 = sphi 0, %s204
      %s208 = sphi 0, %s207
      %s224 = sphi 0, %s208
    $region4: #{tpu_custom_call.1} parent=1 // loop_header_branch
      %24 = sbr.rel (%p22) target = $region8
    $region5: #{tpu_custom_call.1} parent=1 // loop_body
      %s26 = ssub.s32 %s21, 1
      %s27 = ssub.s32 %s21, 2
      %s28 = sadd.s32 %s21, 1
      %s29 = ssub.s32 %s21, %s28
      %p30 = scmp.eq.s32.totalorder %s29, 0
      %s32 = sadd.s32 %s31, 1
      %s33 = scalar_select %p30, %s31, %s32
      %p36 = pneg %p30
      %p37 = scmp.eq.s32.totalorder %s21, 1
      %p38 = por %p36, %p37
      %p39 = scmp.ne.s32.totalorder %s31, %s34
      %p40 = scmp.eq.s32.totalorder %s21, 0
      %p41 = por %p39, %p40
      %p42 = scmp.ne.s32.totalorder %s31, %s34
      %p43 = scmp.eq.s32.totalorder %s26, 1
      %p44 = por %p42, %p43
      %p45 = scmp.ne.s32.totalorder %s34, %s35
      %p46 = scmp.eq.s32.totalorder %s26, 0
      %p47 = por %p45, %p46
      %p48 = scmp.ne.s32.totalorder %s34, %s35
      %p49 = scmp.eq.s32.totalorder %s27, 1
      %p50 = por %p48, %p49
      %p52 = scmp.ne.s32.totalorder %s35, %s51
      %p53 = scmp.eq.s32.totalorder %s27, 0
      %p54 = por %p52, %p53
      %s56 = sadd.s32 %s55, 1
      %p59 = scmp.eq.s32.totalorder %s21, 1
      %p60 = scmp.ne.s32.totalorder %s55, %s57
      %p61 = scmp.eq.s32.totalorder %s21, 0
      %p62 = por %p60, %p61
      %p63 = scmp.ne.s32.totalorder %s55, %s57
      %p64 = scmp.eq.s32.totalorder %s26, 1
      %p65 = por %p63, %p64
      %p66 = scmp.ne.s32.totalorder %s57, %s58
      %p67 = scmp.eq.s32.totalorder %s26, 0
      %p68 = por %p66, %p67
      %p69 = scmp.ne.s32.totalorder %s57, %s58
      %p70 = scmp.eq.s32.totalorder %s27, 1
      %p71 = por %p69, %p70
      %p73 = scmp.ne.s32.totalorder %s58, %s72
      %p74 = scmp.eq.s32.totalorder %s27, 0
      %p75 = por %p73, %p74
      %s77 = sadd.s32 %s76, 1
      %p80 = scmp.eq.s32.totalorder %s21, 1
      %p81 = scmp.ne.s32.totalorder %s76, %s78
      %p82 = scmp.eq.s32.totalorder %s21, 0
      %p83 = por %p81, %p82
      %p84 = scmp.ne.s32.totalorder %s76, %s78
      %p85 = scmp.eq.s32.totalorder %s26, 1
      %p86 = por %p84, %p85
      %p87 = scmp.ne.s32.totalorder %s78, %s79
      %p88 = scmp.eq.s32.totalorder %s26, 0
      %p89 = por %p87, %p88
      %p90 = scmp.ne.s32.totalorder %s78, %s79
      %p91 = scmp.eq.s32.totalorder %s27, 1
      %p92 = por %p90, %p91
      %p94 = scmp.ne.s32.totalorder %s79, %s93
      %p95 = scmp.eq.s32.totalorder %s27, 0
      %p96 = por %p94, %p95
      %s98 = sadd.s32 %s97, 1
      %p101 = scmp.eq.s32.totalorder %s21, 1
      %p102 = scmp.ne.s32.totalorder %s97, %s99
      %p103 = scmp.eq.s32.totalorder %s21, 0
      %p104 = por %p102, %p103
      %p105 = scmp.ne.s32.totalorder %s97, %s99
      %p106 = scmp.eq.s32.totalorder %s26, 1
      %p107 = por %p105, %p106
      %p108 = scmp.ne.s32.totalorder %s99, %s100
      %p109 = scmp.eq.s32.totalorder %s26, 0
      %p110 = por %p108, %p109
      %p111 = scmp.ne.s32.totalorder %s99, %s100
      %p112 = scmp.eq.s32.totalorder %s27, 1
      %p113 = por %p111, %p112
      %p115 = scmp.ne.s32.totalorder %s100, %s114
      %p116 = scmp.eq.s32.totalorder %s27, 0
      %p117 = por %p115, %p116
      %s119 = sadd.s32 %s118, 1
      %p122 = scmp.eq.s32.totalorder %s21, 1
      %p123 = scmp.ne.s32.totalorder %s118, %s120
      %p124 = scmp.eq.s32.totalorder %s21, 0
      %p125 = por %p123, %p124
      %p126 = scmp.ne.s32.totalorder %s118, %s120
      %p127 = scmp.eq.s32.totalorder %s26, 1
      %p128 = por %p126, %p127
      %p129 = scmp.ne.s32.totalorder %s120, %s121
      %p130 = scmp.eq.s32.totalorder %s26, 0
      %p131 = por %p129, %p130
      %p132 = scmp.ne.s32.totalorder %s120, %s121
      %p133 = scmp.eq.s32.totalorder %s27, 1
      %p134 = por %p132, %p133
      %p136 = scmp.ne.s32.totalorder %s121, %s135
      %p137 = scmp.eq.s32.totalorder %s27, 0
      %p138 = por %p136, %p137
      %s140 = sadd.s32 %s139, 1
      %p143 = scmp.eq.s32.totalorder %s21, 1
      %p144 = scmp.ne.s32.totalorder %s139, %s141
      %p145 = scmp.eq.s32.totalorder %s21, 0
      %p146 = por %p144, %p145
      %p147 = scmp.ne.s32.totalorder %s139, %s141
      %p148 = scmp.eq.s32.totalorder %s26, 1
      %p149 = por %p147, %p148
      %p150 = scmp.ne.s32.totalorder %s141, %s142
      %p151 = scmp.eq.s32.totalorder %s26, 0
      %p152 = por %p150, %p151
      %p153 = scmp.ne.s32.totalorder %s141, %s142
      %p154 = scmp.eq.s32.totalorder %s27, 1
      %p155 = por %p153, %p154
      %p157 = scmp.ne.s32.totalorder %s142, %s156
      %p158 = scmp.eq.s32.totalorder %s27, 0
      %p159 = por %p157, %p158
      %s161 = sadd.s32 %s160, 1
      %p164 = scmp.eq.s32.totalorder %s21, 1
      %p165 = scmp.ne.s32.totalorder %s160, %s162
      %p166 = scmp.eq.s32.totalorder %s21, 0
      %p167 = por %p165, %p166
      %p168 = scmp.ne.s32.totalorder %s160, %s162
      %p169 = scmp.eq.s32.totalorder %s26, 1
      %p170 = por %p168, %p169
      %p171 = scmp.ne.s32.totalorder %s162, %s163
      %p172 = scmp.eq.s32.totalorder %s26, 0
      %p173 = por %p171, %p172
      %p174 = scmp.ne.s32.totalorder %s162, %s163
      %p175 = scmp.eq.s32.totalorder %s27, 1
      %p176 = por %p174, %p175
      %p178 = scmp.ne.s32.totalorder %s163, %s177
      %p179 = scmp.eq.s32.totalorder %s27, 0
      %p180 = por %p178, %p179
      %s182 = sadd.s32 %s181, 1
      %p185 = scmp.eq.s32.totalorder %s21, 1
      %p186 = scmp.ne.s32.totalorder %s181, %s183
      %p187 = scmp.eq.s32.totalorder %s21, 0
      %p188 = por %p186, %p187
      %p189 = scmp.ne.s32.totalorder %s181, %s183
      %p190 = scmp.eq.s32.totalorder %s26, 1
      %p191 = por %p189, %p190
      %p192 = scmp.ne.s32.totalorder %s183, %s184
      %p193 = scmp.eq.s32.totalorder %s26, 0
      %p194 = por %p192, %p193
      %p195 = scmp.ne.s32.totalorder %s183, %s184
      %p196 = scmp.eq.s32.totalorder %s27, 1
      %p197 = por %p195, %p196
      %p199 = scmp.ne.s32.totalorder %s184, %s198
      %p200 = scmp.eq.s32.totalorder %s27, 0
      %p201 = por %p199, %p200
      %s202 = ssub.s32 %s21, %s28
      %p203 = scmp.eq.s32.totalorder %s202, 0
      %s205 = sadd.s32 %s204, 1
      %s206 = scalar_select %p203, %s204, %s205
      %p209 = pneg %p203
      %p210 = scmp.eq.s32.totalorder %s21, 1
      %p211 = por %p209, %p210
      %p212 = scmp.ne.s32.totalorder %s204, %s207
      %p213 = scmp.eq.s32.totalorder %s21, 0
      %p214 = por %p212, %p213
      %p215 = scmp.ne.s32.totalorder %s204, %s207
      %p216 = scmp.eq.s32.totalorder %s26, 1
      %p217 = por %p215, %p216
      %p218 = scmp.ne.s32.totalorder %s207, %s208
      %p219 = scmp.eq.s32.totalorder %s26, 0
      %p220 = por %p218, %p219
      %p221 = scmp.ne.s32.totalorder %s207, %s208
      %p222 = scmp.eq.s32.totalorder %s27, 1
      %p223 = por %p221, %p222
      %p225 = scmp.ne.s32.totalorder %s208, %s224
      %p226 = scmp.eq.s32.totalorder %s27, 0
      %p227 = por %p225, %p226
      %p228 = scmp.le.s32.totalorder 1, %s21
      %p229 = scmp.lt.s32.totalorder %s21, 3
      %p230 = pnand %p228, %p229
      %p231 = pneg %p230
      // Predicated region
      $region9: #{tpu_custom_call.1} parent=5 // pred_check
        _
      $region10: #{tpu_custom_call.1} parent=5 // pred_check_branch
        %233 = sbr.rel (%p230) target = $region12
      $region11: #{tpu_custom_call.1} parent=5 // pred_region
        %s234 = ssub.s32 %s21, 1
        // Predicated region
        $region13: #{tpu_custom_call.1} parent=11 // pred_check
          %p235 = pneg %p68
        $region14: #{tpu_custom_call.1} parent=11 // pred_check_branch
          %237 = sbr.rel (%p235) target = $region16
        $region15: #{tpu_custom_call.1} parent=11 // pred_region
          _
        $region16: #{tpu_custom_call.1} parent=11 // pred_fallthru
          _
        // Predicated region
        $region17: #{tpu_custom_call.1} parent=11 // pred_check
          %p238 = pneg %p89
        $region18: #{tpu_custom_call.1} parent=11 // pred_check_branch
          %240 = sbr.rel (%p238) target = $region20
        $region19: #{tpu_custom_call.1} parent=11 // pred_region
          _
        $region20: #{tpu_custom_call.1} parent=11 // pred_fallthru
          _
        // Predicated region
        $region21: #{tpu_custom_call.1} parent=11 // pred_check
          %p241 = pneg %p110
        $region22: #{tpu_custom_call.1} parent=11 // pred_check_branch
          %243 = sbr.rel (%p241) target = $region24
        $region23: #{tpu_custom_call.1} parent=11 // pred_region
          _
        $region24: #{tpu_custom_call.1} parent=11 // pred_fallthru
          _
        // Predicated region
        $region25: #{tpu_custom_call.1} parent=11 // pred_check
          %p244 = pneg %p131
        $region26: #{tpu_custom_call.1} parent=11 // pred_check_branch
          %246 = sbr.rel (%p244) target = $region28
        $region27: #{tpu_custom_call.1} parent=11 // pred_region
          _
        $region28: #{tpu_custom_call.1} parent=11 // pred_fallthru
          _
        // Predicated region
        $region29: #{tpu_custom_call.1} parent=11 // pred_check
          %p247 = pneg %p152
        $region30: #{tpu_custom_call.1} parent=11 // pred_check_branch
          %249 = sbr.rel (%p247) target = $region32
        $region31: #{tpu_custom_call.1} parent=11 // pred_region
          _
        $region32: #{tpu_custom_call.1} parent=11 // pred_fallthru
          _
        // Predicated region
        $region33: #{tpu_custom_call.1} parent=11 // pred_check
          %p250 = pneg %p173
        $region34: #{tpu_custom_call.1} parent=11 // pred_check_branch
          %252 = sbr.rel (%p250) target = $region36
        $region35: #{tpu_custom_call.1} parent=11 // pred_region
          _
        $region36: #{tpu_custom_call.1} parent=11 // pred_fallthru
          _
        // Predicated region
        $region37: #{tpu_custom_call.1} parent=11 // pred_check
          %p253 = pneg %p194
        $region38: #{tpu_custom_call.1} parent=11 // pred_check_branch
          %255 = sbr.rel (%p253) target = $region40
        $region39: #{tpu_custom_call.1} parent=11 // pred_region
          %257 = vsyncadd [#allocation6], 0
          %s258 = sshll.u32 %s7, 4
          %s259 = int_to_ptr.hbm [resolvable:$true] %s258
          %s260 = sshll.u32 [#allocation5], 4
          %s261 = int_to_ptr.vmem [resolvable:$true] %s260
          %266 = dma.hbm_to_vmem [thread:$0]  %s259, 512, %s261, [#allocation6], 128, 128, 8
        $region40: #{tpu_custom_call.1} parent=11 // pred_fallthru
          _
      $region12: #{tpu_custom_call.1} parent=5 // pred_fallthru
        _
      %p267 = scmp.lt.s32.totalorder %s21, 2
      // Predicated region
      $region41: #{tpu_custom_call.1} parent=5 // pred_check
        %p268 = pneg %p267
      $region42: #{tpu_custom_call.1} parent=5 // pred_check_branch
        %270 = sbr.rel (%p268) target = $region44
      $region43: #{tpu_custom_call.1} parent=5 // pred_region
        // Predicated region
        $region45: #{tpu_custom_call.1} parent=43 // pred_check
          %p271 = pneg %p41
        $region46: #{tpu_custom_call.1} parent=43 // pred_check_branch
          %273 = sbr.rel (%p271) target = $region48
        $region47: #{tpu_custom_call.1} parent=43 // pred_region
          %s274 = sand.u32 %s31, 1
          %s275 = scalar_lea.sflag [#allocation3], %s274
          %s276 = sand.u32 %s31, 1
          %s277 = smul.addr %s276, 16
          %s278 = scalar_lea.vmem [#allocation2], %s277
          %s279 = smul.u32 2, %s21
          %s280 = ssub.s32 3, %s279
          %p281 = scmp.lt.s32.totalorder %s280, 2
          %s282 = scalar_select %p281, %s280, 2
          %s283 = smul.u32 8, %s282
          %s284 = ssub.s32 16, %s283
          %s285 = sshll.u32 %s284, 4
          %286 = vsyncadd %s275, %s285
          %p287 = scmp.ne.s32.totalorder 0, %s283
          %s288 = smul.addr %s279, 8
          %s289 = scalar_lea.hbm %s0, %s288
          %s290 = smul.u32 8, %s282
          %s291 = sshll.u32 %s289, 4
          %s292 = int_to_ptr.hbm [resolvable:$true] %s291
          %s293 = sshll.u32 %s278, 4
          %s294 = int_to_ptr.vmem [resolvable:$true] %s293
          %s295 = sshll.u32 %s290, 4
          %299 = dma.hbm_to_vmem [thread:$0]  (%p287), %s292, %s295, %s294, %s275, 128, 128, 8
        $region48: #{tpu_custom_call.1} parent=43 // pred_fallthru
          _
      $region44: #{tpu_custom_call.1} parent=5 // pred_fallthru
        _
      %p300 = scmp.le.s32.totalorder 1, %s21
      %p301 = scmp.lt.s32.totalorder %s21, 3
      %p302 = pnand %p300, %p301
      %p303 = pneg %p302
      // Predicated region
      $region49: #{tpu_custom_call.1} parent=5 // pred_check
        _
      $region50: #{tpu_custom_call.1} parent=5 // pred_check_branch
        %305 = sbr.rel (%p302) target = $region52
      $region51: #{tpu_custom_call.1} parent=5 // pred_region
        %s306 = ssub.s32 %s21, 1
        %s307 = sand.u32 %s34, 1
        %s308 = scalar_lea.sflag [#allocation3], %s307
        %s309 = sand.u32 %s34, 1
        %s310 = smul.addr %s309, 16
        %s311 = scalar_lea.vmem [#allocation2], %s310
        // Predicated region
        $region53: #{tpu_custom_call.1} parent=51 // pred_check
          %p312 = pneg %p47
        $region54: #{tpu_custom_call.1} parent=51 // pred_check_branch
          %314 = sbr.rel (%p312) target = $region56
        $region55: #{tpu_custom_call.1} parent=51 // pred_region
          %316 = dma.done %s308, 256
        $region56: #{tpu_custom_call.1} parent=51 // pred_fallthru
          _
        // Predicated region
        $region57: #{tpu_custom_call.1} parent=51 // pred_check
          %p317 = pneg %p194
        $region58: #{tpu_custom_call.1} parent=51 // pred_check_branch
          %319 = sbr.rel (%p317) target = $region60
        $region59: #{tpu_custom_call.1} parent=51 // pred_region
          %321 = dma.done [#allocation6], 512
        $region60: #{tpu_custom_call.1} parent=51 // pred_fallthru
          _
        %s322 = sand.u32 %s34, 1
        %s323 = scalar_lea.sflag [#allocation3], %s322
        %s324 = sand.u32 %s34, 1
        %s325 = smul.addr %s324, 16
        %s326 = scalar_lea.vmem [#allocation2], %s325
        %p327 = pneg %p47
        %p328 = pneg %p44
        %p329 = pneg %p68
        %p330 = pneg %p65
        %p331 = pneg %p89
        %p332 = pneg %p86
        %p333 = pneg %p110
        %p334 = pneg %p107
        %p335 = pneg %p131
        %p336 = pneg %p128
        %p337 = pneg %p152
        %p338 = pneg %p149
        %p339 = pneg %p173
        %p340 = pneg %p170
        %p341 = pneg %p194
        %p342 = pneg %p191
        %p343 = pneg %p220
        %p344 = pneg %p217
        %s345 = sand.u32 %s207, 1
        %s346 = scalar_lea.sflag [#allocation4], %s345
        %s347 = sand.u32 %s207, 1
        %s348 = smul.addr %s347, 16
        %s349 = scalar_lea.vmem [#allocation7], %s348
        %s350 = smul.u32 2, %s26
        %s351 = ssub.s32 3, %s350
        %p352 = scmp.lt.s32.totalorder %s351, 2
        %s353 = scalar_select %p352, %s351, 2
        %s354 = smul.u32 8, %s353
        %s355 = smul.u32 2, %s26
        %s356 = ssub.s32 3, %s355
        %p357 = scmp.lt.s32.totalorder %s356, 2
        %s358 = scalar_select %p357, %s356, 2
        %s359 = smul.u32 8, %s358
        %v360 = vld [vmem:[%s311] sm:$0xff]
        %v361 = vld [vmem:[%s311 + $0x8] sm:$0xff]
        %v362 = vld [vmem:[%s1] sm:$0xff]
        %v363 = vld [vmem:[%s1 + $0x8] sm:$0xff]
        %v364 = vld [vmem:[%s1 + $0x10] sm:$0xff]
        %v365 = vld [vmem:[%s1 + $0x18] sm:$0xff]
        %v366 = vld [vmem:[%s2] sm:$0x1]
        %v368 = vperm.slane %v366, 0
        %vm370 = vcmask 261120
        %v372 = vsel %vm370, %v360, 0
        %v375 = vsel %vm370, %v361, 0
        %377 = vmatpush.msra.mxu0 0.0
        %378 = vmatpush.msra.mxu0 0.0
        %379 = vmatpush.msra.mxu0 0.0
        %380 = vmatpush.msra.mxu0 0.0
        %381 = vmatpush.msra.mxu0 0.0
        %382 = vmatpush.msra.mxu0 0.0
        %383 = vmatpush.msra.mxu0 0.0
        %384 = vmatpush.msra.mxu0 0.0
        %385 = vmatpush.msra.mxu0 0.0
        %386 = vmatpush.msra.mxu0 0.0
        %387 = vmatpush.msra.mxu0 0.0
        %388 = vmatpush.msra.mxu0 0.0
        %389 = vmatpush.msra.mxu0 %v365
        %390 = vmatpush.msra.mxu0 %v364
        %391 = vmatpush.msra.mxu0 %v363
        %392 = vmatpush.msra.mxu0 %v362
        %393 = vmatmul.f32.gmra.mxu0 %v372
        %v394 = vpop.f32.mrf.mxu0
        %v395 = vadd.f32 %v368, %v394
        %396 = vmatmul.f32.gmra.mxu0 %v375
        %v397 = vpop.f32.mrf.mxu0
        %v398 = vadd.f32 %v368, %v397
        %399 = vdwg.mxu0
        %v400 = vmul.f32 %v395, 0.5
        %v401 = vmul.f32 %v398, 0.5
        %v402 = vmul.f32 %v395, 0.70710677
        %v403 = vmul.f32 %v398, 0.70710677
        %v404 = vmul.f32 %v402, %v402
        %v405 = vmin.f32 16.0, %v404
        %v406 = vmul.f32 %v405, 2.1237322e-06
        %v407 = vadd.f32 %v406, 0.00028619796
        %v408 = vmul.f32 %v405, %v407
        %v409 = vadd.f32 %v408, 0.0036580483
        %v410 = vmul.f32 %v405, %v409
        %v411 = vadd.f32 %v410, 0.05243302
        %v412 = vmul.f32 %v405, %v411
        %v413 = vadd.f32 %v412, 0.18741608
        %v414 = vmul.f32 %v405, %v413
        %v415 = vadd.f32 %v414, 1.1283791
        %v416 = vmul.f32 %v402, %v415
        %v417 = vmul.f32 %v405, 3.8918573e-05
        %v418 = vadd.f32 %v417, 0.001143296
        %v419 = vmul.f32 %v405, %v418
        %v420 = vadd.f32 %v419, 0.014752088
        %v421 = vmul.f32 %v405, %v420
        %v422 = vadd.f32 %v421, 0.112945676
        %v423 = vmul.f32 %v405, %v422
        %v424 = vadd.f32 %v423, 0.4994258
        %v425 = vmul.f32 %v405, %v424
        %v426 = vadd.f32 %v425, 1.0
        %v427 = vrcp.pop %v426
        %v428 = vmul.f32 %v426, %v427
        %v429 = vsub.f32 1.0, %v428
        %v430 = vmul.f32 %v427, %v429
        %v431 = vadd.f32 %v427, %v430
        %vm432 = vweird.f32 %v426
        %vm433 = vweird.f32 %v427
        %vm434 = vmor %vm432, %vm433
        %v435 = vsel %vm434, %v427, %v431
        %v436 = vand.u32 2147483647, %v426
        %vm437 = vcmp.eq.f32.partialorder %v436, 8.507059e+37
        %v438 = vand.u32 %v426, 2147483648
        %v439 = vor.u32 1.1754944e-38, %v438
        %v440 = vsel %vm437, %v439, %v435
        %v441 = vmul.f32 %v416, %v440
        %v442 = vmin.f32 %v441, 1.0
        %v443 = vmax.f32 %v442, -1.0
        %v444 = vmul.f32 %v403, %v403
        %v445 = vmin.f32 16.0, %v444
        %v446 = vmul.f32 %v445, 2.1237322e-06
        %v447 = vadd.f32 %v446, 0.00028619796
        %v448 = vmul.f32 %v445, %v447
        %v449 = vadd.f32 %v448, 0.0036580483
        %v450 = vmul.f32 %v445, %v449
        %v451 = vadd.f32 %v450, 0.05243302
        %v452 = vmul.f32 %v445, %v451
        %v453 = vadd.f32 %v452, 0.18741608
        %v454 = vmul.f32 %v445, %v453
        %v455 = vadd.f32 %v454, 1.1283791
        %v456 = vmul.f32 %v403, %v455
        %v457 = vmul.f32 %v445, 3.8918573e-05
        %v458 = vadd.f32 %v457, 0.001143296
        %v459 = vmul.f32 %v445, %v458
        %v460 = vadd.f32 %v459, 0.014752088
        %v461 = vmul.f32 %v445, %v460
        %v462 = vadd.f32 %v461, 0.112945676
        %v463 = vmul.f32 %v445, %v462
        %v464 = vadd.f32 %v463, 0.4994258
        %v465 = vmul.f32 %v445, %v464
        %v466 = vadd.f32 %v465, 1.0
        %v467 = vrcp.pop %v466
        %v468 = vmul.f32 %v466, %v467
        %v469 = vsub.f32 1.0, %v468
        %v470 = vmul.f32 %v467, %v469
        %v471 = vadd.f32 %v467, %v470
        %vm472 = vweird.f32 %v466
        %vm473 = vweird.f32 %v467
        %vm474 = vmor %vm472, %vm473
        %v475 = vsel %vm474, %v467, %v471
        %v476 = vand.u32 2147483647, %v466
        %vm477 = vcmp.eq.f32.partialorder %v476, 8.507059e+37
        %v478 = vand.u32 %v466, 2147483648
        %v479 = vor.u32 1.1754944e-38, %v478
        %v480 = vsel %vm477, %v479, %v475
        %v481 = vmul.f32 %v456, %v480
        %v482 = vmin.f32 %v481, 1.0
        %v483 = vmax.f32 %v482, -1.0
        %v484 = vadd.f32 %v443, 1.0
        %v485 = vadd.f32 %v483, 1.0
        %v486 = vmul.f32 %v400, %v484
        %v487 = vmul.f32 %v401, %v485
        %v488 = vld [vmem:[%s3] sm:$0xff]
        %v489 = vld [vmem:[%s3 + $0x8] sm:$0xff]
        %v490 = vld [vmem:[%s3 + $0x10] sm:$0xff]
        %v491 = vld [vmem:[%s3 + $0x18] sm:$0xff]
        %v492 = vld [vmem:[%s3 + $0x20] sm:$0xff]
        %v493 = vld [vmem:[%s3 + $0x28] sm:$0xff]
        %v494 = vld [vmem:[%s3 + $0x30] sm:$0xff]
        %v495 = vld [vmem:[%s3 + $0x38] sm:$0xff]
        %v496 = vld [vmem:[%s4] sm:$0x1]
        %v498 = vperm.slane %v496, 0
        %vm500 = vcmask 523264
        %v502 = vsel %vm500, %v486, 0
        %v505 = vsel %vm500, %v487, 0
        %507 = vmatpush.msra.mxu0 0.0
        %508 = vmatpush.msra.mxu0 0.0
        %509 = vmatpush.msra.mxu0 0.0
        %510 = vmatpush.msra.mxu0 0.0
        %511 = vmatpush.msra.mxu0 0.0
        %512 = vmatpush.msra.mxu0 0.0
        %513 = vmatpush.msra.mxu0 0.0
        %514 = vmatpush.msra.mxu0 0.0
        %515 = vmatpush.msra.mxu0 %v495
        %516 = vmatpush.msra.mxu0 %v494
        %517 = vmatpush.msra.mxu0 %v493
        %518 = vmatpush.msra.mxu0 %v492
        %519 = vmatpush.msra.mxu0 %v491
        %520 = vmatpush.msra.mxu0 %v490
        %521 = vmatpush.msra.mxu0 %v489
        %522 = vmatpush.msra.mxu0 %v488
        %523 = vmatmul.f32.gmra.mxu0 %v502
        %v524 = vpop.f32.mrf.mxu0
        %v525 = vadd.f32 %v498, %v524
        %526 = vmatmul.f32.gmra.mxu0 %v505
        %v527 = vpop.f32.mrf.mxu0
        %v528 = vadd.f32 %v498, %v527
        %529 = vdwg.mxu0
        %v530 = vmul.f32 %v525, 0.5
        %v531 = vmul.f32 %v528, 0.5
        %v532 = vmul.f32 %v525, 0.70710677
        %v533 = vmul.f32 %v528, 0.70710677
        %v534 = vmul.f32 %v532, %v532
        %v535 = vmin.f32 16.0, %v534
        %v536 = vmul.f32 %v535, 2.1237322e-06
        %v537 = vadd.f32 %v536, 0.00028619796
        %v538 = vmul.f32 %v535, %v537
        %v539 = vadd.f32 %v538, 0.0036580483
        %v540 = vmul.f32 %v535, %v539
        %v541 = vadd.f32 %v540, 0.05243302
        %v542 = vmul.f32 %v535, %v541
        %v543 = vadd.f32 %v542, 0.18741608
        %v544 = vmul.f32 %v535, %v543
        %v545 = vadd.f32 %v544, 1.1283791
        %v546 = vmul.f32 %v532, %v545
        %v547 = vmul.f32 %v535, 3.8918573e-05
        %v548 = vadd.f32 %v547, 0.001143296
        %v549 = vmul.f32 %v535, %v548
        %v550 = vadd.f32 %v549, 0.014752088
        %v551 = vmul.f32 %v535, %v550
        %v552 = vadd.f32 %v551, 0.112945676
        %v553 = vmul.f32 %v535, %v552
        %v554 = vadd.f32 %v553, 0.4994258
        %v555 = vmul.f32 %v535, %v554
        %v556 = vadd.f32 %v555, 1.0
        %v557 = vrcp.pop %v556
        %v558 = vmul.f32 %v556, %v557
        %v559 = vsub.f32 1.0, %v558
        %v560 = vmul.f32 %v557, %v559
        %v561 = vadd.f32 %v557, %v560
        %vm562 = vweird.f32 %v556
        %vm563 = vweird.f32 %v557
        %vm564 = vmor %vm562, %vm563
        %v565 = vsel %vm564, %v557, %v561
        %v566 = vand.u32 2147483647, %v556
        %vm567 = vcmp.eq.f32.partialorder %v566, 8.507059e+37
        %v568 = vand.u32 %v556, 2147483648
        %v569 = vor.u32 1.1754944e-38, %v568
        %v570 = vsel %vm567, %v569, %v565
        %v571 = vmul.f32 %v546, %v570
        %v572 = vmin.f32 %v571, 1.0
        %v573 = vmax.f32 %v572, -1.0
        %v574 = vmul.f32 %v533, %v533
        %v575 = vmin.f32 16.0, %v574
        %v576 = vmul.f32 %v575, 2.1237322e-06
        %v577 = vadd.f32 %v576, 0.00028619796
        %v578 = vmul.f32 %v575, %v577
        %v579 = vadd.f32 %v578, 0.0036580483
        %v580 = vmul.f32 %v575, %v579
        %v581 = vadd.f32 %v580, 0.05243302
        %v582 = vmul.f32 %v575, %v581
        %v583 = vadd.f32 %v582, 0.18741608
        %v584 = vmul.f32 %v575, %v583
        %v585 = vadd.f32 %v584, 1.1283791
        %v586 = vmul.f32 %v533, %v585
        %v587 = vmul.f32 %v575, 3.8918573e-05
        %v588 = vadd.f32 %v587, 0.001143296
        %v589 = vmul.f32 %v575, %v588
        %v590 = vadd.f32 %v589, 0.014752088
        %v591 = vmul.f32 %v575, %v590
        %v592 = vadd.f32 %v591, 0.112945676
        %v593 = vmul.f32 %v575, %v592
        %v594 = vadd.f32 %v593, 0.4994258
        %v595 = vmul.f32 %v575, %v594
        %v596 = vadd.f32 %v595, 1.0
        %v597 = vrcp.pop %v596
        %v598 = vmul.f32 %v596, %v597
        %v599 = vsub.f32 1.0, %v598
        %v600 = vmul.f32 %v597, %v599
        %v601 = vadd.f32 %v597, %v600
        %vm602 = vweird.f32 %v596
        %vm603 = vweird.f32 %v597
        %vm604 = vmor %vm602, %vm603
        %v605 = vsel %vm604, %v597, %v601
        %v606 = vand.u32 2147483647, %v596
        %vm607 = vcmp.eq.f32.partialorder %v606, 8.507059e+37
        %v608 = vand.u32 %v596, 2147483648
        %v609 = vor.u32 1.1754944e-38, %v608
        %v610 = vsel %vm607, %v609, %v605
        %v611 = vmul.f32 %v586, %v610
        %v612 = vmin.f32 %v611, 1.0
        %v613 = vmax.f32 %v612, -1.0
        %v614 = vadd.f32 %v573, 1.0
        %v615 = vadd.f32 %v613, 1.0
        %v616 = vmul.f32 %v530, %v614
        %v617 = vmul.f32 %v531, %v615
        %v618 = vld [vmem:[%s5] sm:$0xff]
        %v619 = vld [vmem:[%s5 + $0x8] sm:$0xff]
        %v620 = vld [vmem:[%s5 + $0x10] sm:$0xff]
        %v621 = vld [vmem:[%s5 + $0x18] sm:$0xff]
        %v622 = vld [vmem:[%s5 + $0x20] sm:$0xff]
        %v623 = vld [vmem:[%s5 + $0x28] sm:$0xff]
        %v624 = vld [vmem:[%s5 + $0x30] sm:$0xff]
        %v625 = vld [vmem:[%s5 + $0x38] sm:$0xff]
        %v626 = vld [vmem:[%s6] sm:$0x1]
        %v628 = vperm.slane %v626, 0
        %v631 = vsel %vm500, %v616, 0
        %v634 = vsel %vm500, %v617, 0
        %636 = vmatpush.msra.mxu0 0.0
        %637 = vmatpush.msra.mxu0 0.0
        %638 = vmatpush.msra.mxu0 0.0
        %639 = vmatpush.msra.mxu0 0.0
        %640 = vmatpush.msra.mxu0 0.0
        %641 = vmatpush.msra.mxu0 0.0
        %642 = vmatpush.msra.mxu0 0.0
        %643 = vmatpush.msra.mxu0 0.0
        %644 = vmatpush.msra.mxu0 %v625
        %645 = vmatpush.msra.mxu0 %v624
        %646 = vmatpush.msra.mxu0 %v623
        %647 = vmatpush.msra.mxu0 %v622
        %648 = vmatpush.msra.mxu0 %v621
        %649 = vmatpush.msra.mxu0 %v620
        %650 = vmatpush.msra.mxu0 %v619
        %651 = vmatpush.msra.mxu0 %v618
        %652 = vmatmul.f32.gmra.mxu0 %v631
        %v653 = vpop.f32.mrf.mxu0
        %v654 = vadd.f32 %v628, %v653
        %655 = vmatmul.f32.gmra.mxu0 %v634
        %v656 = vpop.f32.mrf.mxu0
        %v657 = vadd.f32 %v628, %v656
        %658 = vdwg.mxu0
        %v659 = vmul.f32 %v654, %v654
        %v660 = vmul.f32 %v657, %v657
        %v661 = vsel %vm370, %v659, 0.0
        %662 = vadd.xlane.f32.xlu0 %v661
        %v663 = vpop.xlane.xlu0 %662
        %v664 = vsel %vm370, %v660, 0.0
        %665 = vadd.xlane.f32.xlu0 %v664
        %v666 = vpop.xlane.xlu0 %665
        %v667 = vmax.f32 %v663, 1e-24
        %v668 = vmax.f32 %v666, 1e-24
        %v669 = vrsqrt.pop %v667
        %v670 = vmul.f32 %v669, %v667
        %v671 = vmul.f32 %v670, %v669
        %v672 = vmul.f32 0.5, %v671
        %v673 = vsub.f32 1.5, %v672
        %v674 = vmul.f32 %v669, %v673
        %vm675 = vweird.f32 %v667
        %vm676 = vweird.f32 %v669
        %vm677 = vmor %vm675, %vm676
        %v678 = vsel %vm677, %v669, %v674
        %v679 = vrsqrt.pop %v668
        %v680 = vmul.f32 %v679, %v668
        %v681 = vmul.f32 %v680, %v679
        %v682 = vmul.f32 0.5, %v681
        %v683 = vsub.f32 1.5, %v682
        %v684 = vmul.f32 %v679, %v683
        %vm685 = vweird.f32 %v668
        %vm686 = vweird.f32 %v679
        %vm687 = vmor %vm685, %vm686
        %v688 = vsel %vm687, %v679, %v684
        %v689 = vmul.f32 %v654, %v678
        %v690 = vmul.f32 %v657, %v688
        %v691 = vld [vmem:[#allocation5] sm:$0xff]
        %v692 = vld [vmem:[#allocation5 + $0x8] sm:$0xff]
        %v693 = vld [vmem:[#allocation5 + $0x10] sm:$0xff]
        %v694 = vld [vmem:[#allocation5 + $0x18] sm:$0xff]
        %v696 = vsel %vm370, %v689, 0
        %v699 = vsel %vm370, %v690, 0
        %701 = vmatpush.msra.mxu0 0.0
        %702 = vmatpush.msra.mxu0 0.0
        %703 = vmatpush.msra.mxu0 0.0
        %704 = vmatpush.msra.mxu0 0.0
        %705 = vmatpush.msra.mxu0 0.0
        %706 = vmatpush.msra.mxu0 0.0
        %707 = vmatpush.msra.mxu0 0.0
        %708 = vmatpush.msra.mxu0 0.0
        %709 = vmatpush.msra.mxu0 0.0
        %710 = vmatpush.msra.mxu0 0.0
        %711 = vmatpush.msra.mxu0 0.0
        %712 = vmatpush.msra.mxu0 0.0
        %713 = vmatpush.msra.mxu0 %v694
        %714 = vmatpush.msra.mxu0 %v693
        %715 = vmatpush.msra.mxu0 %v692
        %716 = vmatpush.msra.mxu0 %v691
        %717 = vmatmul.f32.gmra.mxu0 %v696
        %v718 = vpop.f32.mrf.mxu0
        %v719 = vadd.f32 0.0, %v718
        %720 = vmatmul.f32.gmra.mxu0 %v699
        %v721 = vpop.f32.mrf.mxu0
        %v722 = vadd.f32 0.0, %v721
        %723 = vdwg.mxu0
        %724 = vst [vmem:[%s349] sm:$0xff] %v719
        %725 = vst [vmem:[%s349 + $0x8] sm:$0xff] %v722
        %s726 = sand.u32 %s207, 1
        %s727 = scalar_lea.sflag [#allocation4], %s726
        %s728 = sand.u32 %s207, 1
        %s729 = smul.addr %s728, 16
        %s730 = scalar_lea.vmem [#allocation7], %s729
        // Predicated region
        $region61: #{tpu_custom_call.1} parent=51 // pred_check
          %p731 = pneg %p217
        $region62: #{tpu_custom_call.1} parent=51 // pred_check_branch
          %733 = sbr.rel (%p731) target = $region64
        $region63: #{tpu_custom_call.1} parent=51 // pred_region
          %s734 = smul.u32 2, %s26
          %s735 = ssub.s32 3, %s734
          %p736 = scmp.lt.s32.totalorder %s735, 2
          %s737 = scalar_select %p736, %s735, 2
          %s738 = smul.u32 8, %s737
          %s739 = ssub.s32 16, %s738
          %s740 = sshll.u32 %s739, 4
          %741 = vsyncadd %s727, %s740
          %p742 = scmp.ne.s32.totalorder 0, %s738
          %s743 = smul.addr %s734, 8
          %s744 = scalar_lea.hbm %s8, %s743
          %s745 = smul.u32 8, %s737
          %s746 = sshll.u32 %s730, 4
          %s747 = int_to_ptr.vmem [resolvable:$true] %s746
          %s748 = sshll.u32 %s744, 4
          %s749 = int_to_ptr.hbm [resolvable:$true] %s748
          %s750 = sshll.u32 %s745, 4
          %754 = dma.vmem_to_hbm [thread:$0]  (%p742), %s747, %s750, %s749, %s727, 128, 128, 8
        $region64: #{tpu_custom_call.1} parent=51 // pred_fallthru
          _
      $region52: #{tpu_custom_call.1} parent=5 // pred_fallthru
        _
      %p755 = scmp.le.s32.totalorder 2, %s21
      // Predicated region
      $region65: #{tpu_custom_call.1} parent=5 // pred_check
        %p756 = pneg %p755
      $region66: #{tpu_custom_call.1} parent=5 // pred_check_branch
        %758 = sbr.rel (%p756) target = $region68
      $region67: #{tpu_custom_call.1} parent=5 // pred_region
        %s759 = ssub.s32 %s21, 2
        // Predicated region
        $region69: #{tpu_custom_call.1} parent=67 // pred_check
          %p760 = pneg %p223
        $region70: #{tpu_custom_call.1} parent=67 // pred_check_branch
          %762 = sbr.rel (%p760) target = $region72
        $region71: #{tpu_custom_call.1} parent=67 // pred_region
          %s763 = sand.u32 %s208, 1
          %s764 = scalar_lea.sflag [#allocation4], %s763
          %s765 = sand.u32 %s208, 1
          %s766 = smul.addr %s765, 16
          %s767 = scalar_lea.vmem [#allocation7], %s766
          %769 = dma.done %s764, 256
        $region72: #{tpu_custom_call.1} parent=67 // pred_fallthru
          _
      $region68: #{tpu_custom_call.1} parent=5 // pred_fallthru
        _
    $region6: #{tpu_custom_call.1} parent=1 // loop_footer
      %s25 = sadd.s32 1, %s21
    $region7: #{tpu_custom_call.1} parent=1 // loop_footer_branch
      %20 = sbr.rel target = $region3
    $region8: #{tpu_custom_call.1} parent=1 // loop_exit
      _
    %770 = vsyncpa [#allocation3], 1
    %s771 = scalar_lea.sflag [#allocation3], 1
    %772 = vsyncpa %s771, 1
    %773 = vsyncpa [#allocation6], 1
    %774 = vsyncpa [#allocation4], 1
    %s775 = scalar_lea.sflag [#allocation4], 1
    %776 = vsyncpa %s775, 1

</llo_original>
